<compile_context>
chip_gen: v5e
topology: v5e:2x2
jax: 0.10.0
libtpu: 0.0.40
codegen_flags: <defaults>
</compile_context>

<pallas_src>
import jax
import jax.numpy as jnp
from jax.experimental import pallas as pl
from jax.experimental.pallas import tpu as pltpu


def _survival_head_kernel(
    x_ref,
    w1_ref, t1_ref,
    w2_ref, t2_ref,
    w3_ref, t3_ref,
    w4_ref, t4_ref,
    out_ref,
):
    """One (TM, latent_dim) batch tile -> (TM, 128) lane-dense risk tile."""
    # fc1+bn1 -> relu   (dropout = identity in eval mode)
    h = jnp.dot(x_ref[...], w1_ref[...], preferred_element_type=jnp.float32)
    h = jnp.maximum(h + t1_ref[...], 0.0)
    # fc2+bn2 -> relu
    h = jnp.dot(h.astype(jnp.bfloat16), w2_ref[...],
                preferred_element_type=jnp.float32)
    h = jnp.maximum(h + t2_ref[...], 0.0)
    # fc3+bn3 -> relu
    h = jnp.dot(h.astype(jnp.bfloat16), w3_ref[...],
                preferred_element_type=jnp.float32)
    h = jnp.maximum(h + t3_ref[...], 0.0)
    # fc4 (single output column): VPU multiply + cross-lane reduce on the XLU
    # instead of a 1-lane MXU matmul; broadcast so the store is lane-dense.
    risk = jnp.sum(h * w4_ref[...], axis=-1, keepdims=True) + t4_ref[...]
    out_ref[...] = jnp.broadcast_to(risk, out_ref.shape).astype(out_ref.dtype)


def survival_head_forward(x, params, eps=1e-5):
    """x: (B, latent_dim) float32. params: dict of weights / BN stats."""
    B, latent_dim = x.shape

    def fold(w, b, gamma, beta, mean, var):
        # y = BN(xW + b) = x (W*scale) + ((b - mean)*scale + beta)
        scale = gamma / jnp.sqrt(var + eps)
        w_folded = (w * scale[None, :]).astype(jnp.bfloat16)
        shift = ((b - mean) * scale + beta).reshape(1, -1).astype(jnp.float32)
        return w_folded, shift

    w1, t1 = fold(params["w1"], params["b1"], params["bn1_g"], params["bn1_b"],
                  params["bn1_m"], params["bn1_v"])
    w2, t2 = fold(params["w2"], params["b2"], params["bn2_g"], params["bn2_b"],
                  params["bn2_m"], params["bn2_v"])
    w3, t3 = fold(params["w3"], params["b3"], params["bn3_g"], params["bn3_b"],
                  params["bn3_m"], params["bn3_v"])
    # fc4 kept as an f32 row (1, 128) for the VPU-multiply + lane-reduce path.
    w4 = params["w4"].reshape(1, -1).astype(jnp.float32)
    t4 = params["b4"].reshape(1, 1).astype(jnp.float32)

    # Batch tiling: TM rows per grid step (sublane-aligned), weights resident.
    def round_up(n, m):
        return -(-n // m) * m

    TM = min(128, round_up(B, 8))
    Bp = round_up(B, TM)
    x_p = x.astype(jnp.bfloat16)
    if Bp != B:
        x_p = jnp.pad(x_p, ((0, Bp - B), (0, 0)))
    grid = (Bp // TM,)

    def x_map(i):
        return (i, 0)

    def const_map(i):
        return (0, 0)

    in_specs = [
        pl.BlockSpec((TM, latent_dim), x_map),
        pl.BlockSpec(w1.shape, const_map), pl.BlockSpec(t1.shape, const_map),
        pl.BlockSpec(w2.shape, const_map), pl.BlockSpec(t2.shape, const_map),
        pl.BlockSpec(w3.shape, const_map), pl.BlockSpec(t3.shape, const_map),
        pl.BlockSpec(w4.shape, const_map), pl.BlockSpec(t4.shape, const_map),
    ]
    out_spec = pl.BlockSpec((TM, 128), x_map)

    out = pl.pallas_call(
        _survival_head_kernel,
        out_shape=jax.ShapeDtypeStruct((Bp, 128), jnp.float32),
        grid=grid,
        in_specs=in_specs,
        out_specs=out_spec,
        compiler_params=pltpu.CompilerParams(
            dimension_semantics=("parallel",)),
    )(x_p, w1, t1, w2, t2, w3, t3, w4, t4)

    # Risk is replicated across the 128 output lanes; take column 0.
    return out[:B, :1]


def init_params(key, latent_dim):
    """PyTorch-default Linear init (uniform +/- 1/sqrt(fan_in)) + non-trivial BN stats."""
    dims = [latent_dim, 512, 256, 128, 1]
    params = {}
    keys = jax.random.split(key, 20)
    ki = 0
    for i, (din, dout) in enumerate(zip(dims[:-1], dims[1:]), start=1):
        bound = 1.0 / jnp.sqrt(jnp.float32(din))
        # Weight stored pre-transposed: (in, out)
        params[f"w{i}"] = jax.random.uniform(
            keys[ki], (din, dout), jnp.float32, -bound, bound); ki += 1
        params[f"b{i}"] = jax.random.uniform(
            keys[ki], (dout,), jnp.float32, -bound, bound); ki += 1
    # BatchNorm1d: use slightly non-trivial (but deterministic) running stats
    # so the in-wrapper fold is actually exercised.
    for i, c in zip((1, 2, 3), (512, 256, 128)):
        params[f"bn{i}_g"] = 1.0 + 0.1 * jax.random.normal(keys[ki], (c,), jnp.float32); ki += 1
        params[f"bn{i}_b"] = 0.1 * jax.random.normal(keys[ki], (c,), jnp.float32); ki += 1
        params[f"bn{i}_m"] = 0.1 * jax.random.normal(keys[ki], (c,), jnp.float32); ki += 1
        params[f"bn{i}_v"] = 1.0 + 0.1 * jax.random.uniform(keys[ki], (c,), jnp.float32); ki += 1
    return params


def reference_forward(x, params, eps=1e-5):
    """Pure-JAX fp32 reference (eval-mode semantics) for correctness checking."""
    h = x @ params["w1"] + params["b1"]
    h = (h - params["bn1_m"]) / jnp.sqrt(params["bn1_v"] + eps) * params["bn1_g"] + params["bn1_b"]
    h = jnp.maximum(h, 0.0)
    h = h @ params["w2"] + params["b2"]
    h = (h - params["bn2_m"]) / jnp.sqrt(params["bn2_v"] + eps) * params["bn2_g"] + params["bn2_b"]
    h = jnp.maximum(h, 0.0)
    h = h @ params["w3"] + params["b3"]
    h = (h - params["bn3_m"]) / jnp.sqrt(params["bn3_v"] + eps) * params["bn3_g"] + params["bn3_b"]
    h = jnp.maximum(h, 0.0)
    return h @ params["w4"] + params["b4"]


if __name__ == "__main__":
    key = jax.random.PRNGKey(0)
    k_x, k_p = jax.random.split(key)

    B, latent_dim = 8, 32
    x = jax.random.normal(k_x, (B, latent_dim), jnp.float32)
    params = init_params(k_p, latent_dim)

    risk = survival_head_forward(x, params)
    jax.block_until_ready(risk)

    ref = reference_forward(x, params)
    assert risk.shape == (B, 1), risk.shape
    # Kernel uses bf16 weights/activations (f32 accumulation); loose tolerance
    # against the full-fp32 reference.
    assert jnp.allclose(risk, ref, atol=5e-2, rtol=5e-2), (risk, ref)

    print("KERNEL_OK")
</pallas_src>

<mosaic_0001>
module attributes {stable_mosaic.version = 11 : i64} {
  func.func @_survival_head_kernel(%arg0: i32, %arg1: memref<8x32xbf16, #tpu.memory_space<vmem>>, %arg2: memref<32x512xbf16, #tpu.memory_space<vmem>>, %arg3: memref<1x512xf32, #tpu.memory_space<vmem>>, %arg4: memref<512x256xbf16, #tpu.memory_space<vmem>>, %arg5: memref<1x256xf32, #tpu.memory_space<vmem>>, %arg6: memref<256x128xbf16, #tpu.memory_space<vmem>>, %arg7: memref<1x128xf32, #tpu.memory_space<vmem>>, %arg8: memref<1x128xf32, #tpu.memory_space<vmem>>, %arg9: memref<1x1xf32, #tpu.memory_space<vmem>>, %arg10: memref<8x128xf32, #tpu.memory_space<vmem>>) attributes {dimension_semantics = [#tpu.dimension_semantics<parallel>], iteration_bounds = array<i64: 1>, scalar_prefetch = 0 : i64, scratch_operands = 0 : i64, tpu.core_type = #tpu.core_type<tc>, window_params = [{transform_indices = @transform_0, window_bounds = array<i64: 8, 32>}, {pipeline_mode = #tpu.pipeline_mode<synchronous>, transform_indices = @transform_1, window_bounds = array<i64: 32, 512>}, {pipeline_mode = #tpu.pipeline_mode<synchronous>, transform_indices = @transform_2, window_bounds = array<i64: 1, 512>}, {pipeline_mode = #tpu.pipeline_mode<synchronous>, transform_indices = @transform_3, window_bounds = array<i64: 512, 256>}, {pipeline_mode = #tpu.pipeline_mode<synchronous>, transform_indices = @transform_4, window_bounds = array<i64: 1, 256>}, {pipeline_mode = #tpu.pipeline_mode<synchronous>, transform_indices = @transform_5, window_bounds = array<i64: 256, 128>}, {pipeline_mode = #tpu.pipeline_mode<synchronous>, transform_indices = @transform_6, window_bounds = array<i64: 1, 128>}, {pipeline_mode = #tpu.pipeline_mode<synchronous>, transform_indices = @transform_7, window_bounds = array<i64: 1, 128>}, {pipeline_mode = #tpu.pipeline_mode<synchronous>, transform_indices = @transform_8, window_bounds = array<i64: 1, 1>}, {transform_indices = @transform_9, window_bounds = array<i64: 8, 128>}]} {
    %c0 = arith.constant 0 : index
    %c0_0 = arith.constant 0 : index
    %0 = vector.load %arg1[%c0, %c0_0] : memref<8x32xbf16, #tpu.memory_space<vmem>>, vector<8x32xbf16>
    %c0_1 = arith.constant 0 : index
    %c0_2 = arith.constant 0 : index
    %1 = vector.load %arg2[%c0_1, %c0_2] : memref<32x512xbf16, #tpu.memory_space<vmem>>, vector<32x512xbf16>
    %cst = arith.constant dense<0.000000e+00> : vector<8x512xf32>
    %2 = tpu.matmul %0, %1, %cst {dimension_numbers = #tpu.dot_dimension_numbers<[1], [0], [0], [1], [0, 0, 1, 1], [], []>} : vector<8x32xbf16>, vector<32x512xbf16>, vector<8x512xf32> -> vector<8x512xf32>
    %c0_3 = arith.constant 0 : index
    %c0_4 = arith.constant 0 : index
    %3 = vector.load %arg3[%c0_3, %c0_4] : memref<1x512xf32, #tpu.memory_space<vmem>>, vector<1x512xf32>
    %4 = vector.broadcast %3 : vector<1x512xf32> to vector<8x512xf32>
    %5 = arith.addf %2, %4 : vector<8x512xf32>
    %cst_5 = arith.constant 0.000000e+00 : f32
    %6 = vector.broadcast %cst_5 : f32 to vector<8x512xf32>
    %7 = arith.maximumf %5, %6 : vector<8x512xf32>
    %8 = arith.truncf %7 : vector<8x512xf32> to vector<8x512xbf16>
    %c0_6 = arith.constant 0 : index
    %c0_7 = arith.constant 0 : index
    %9 = vector.load %arg4[%c0_6, %c0_7] : memref<512x256xbf16, #tpu.memory_space<vmem>>, vector<512x256xbf16>
    %cst_8 = arith.constant dense<0.000000e+00> : vector<8x256xf32>
    %10 = tpu.matmul %8, %9, %cst_8 {dimension_numbers = #tpu.dot_dimension_numbers<[1], [0], [0], [1], [0, 0, 1, 1], [], []>} : vector<8x512xbf16>, vector<512x256xbf16>, vector<8x256xf32> -> vector<8x256xf32>
    %c0_9 = arith.constant 0 : index
    %c0_10 = arith.constant 0 : index
    %11 = vector.load %arg5[%c0_9, %c0_10] : memref<1x256xf32, #tpu.memory_space<vmem>>, vector<1x256xf32>
    %12 = vector.broadcast %11 : vector<1x256xf32> to vector<8x256xf32>
    %13 = arith.addf %10, %12 : vector<8x256xf32>
    %cst_11 = arith.constant 0.000000e+00 : f32
    %14 = vector.broadcast %cst_11 : f32 to vector<8x256xf32>
    %15 = arith.maximumf %13, %14 : vector<8x256xf32>
    %16 = arith.truncf %15 : vector<8x256xf32> to vector<8x256xbf16>
    %c0_12 = arith.constant 0 : index
    %c0_13 = arith.constant 0 : index
    %17 = vector.load %arg6[%c0_12, %c0_13] : memref<256x128xbf16, #tpu.memory_space<vmem>>, vector<256x128xbf16>
    %cst_14 = arith.constant dense<0.000000e+00> : vector<8x128xf32>
    %18 = tpu.matmul %16, %17, %cst_14 {dimension_numbers = #tpu.dot_dimension_numbers<[1], [0], [0], [1], [0, 0, 1, 1], [], []>} : vector<8x256xbf16>, vector<256x128xbf16>, vector<8x128xf32> -> vector<8x128xf32>
    %c0_15 = arith.constant 0 : index
    %c0_16 = arith.constant 0 : index
    %19 = vector.load %arg7[%c0_15, %c0_16] : memref<1x128xf32, #tpu.memory_space<vmem>>, vector<1x128xf32>
    %20 = vector.broadcast %19 : vector<1x128xf32> to vector<8x128xf32>
    %21 = arith.addf %18, %20 : vector<8x128xf32>
    %cst_17 = arith.constant 0.000000e+00 : f32
    %22 = vector.broadcast %cst_17 : f32 to vector<8x128xf32>
    %23 = arith.maximumf %21, %22 : vector<8x128xf32>
    %c0_18 = arith.constant 0 : index
    %c0_19 = arith.constant 0 : index
    %24 = vector.load %arg8[%c0_18, %c0_19] : memref<1x128xf32, #tpu.memory_space<vmem>>, vector<1x128xf32>
    %25 = vector.broadcast %24 : vector<1x128xf32> to vector<8x128xf32>
    %26 = arith.mulf %23, %25 : vector<8x128xf32>
    %cst_20 = arith.constant dense<0.000000e+00> : vector<8xf32>
    %27 = vector.multi_reduction <add>, %26, %cst_20 [1] : vector<8x128xf32> to vector<8xf32>
    %28 = vector.shape_cast %27 : vector<8xf32> to vector<8x1xf32>
    %c0_21 = arith.constant 0 : index
    %c0_22 = arith.constant 0 : index
    %29 = vector.load %arg9[%c0_21, %c0_22] : memref<1x1xf32, #tpu.memory_space<vmem>>, vector<1x1xf32>
    %30 = vector.broadcast %29 : vector<1x1xf32> to vector<8x1xf32>
    %31 = arith.addf %28, %30 : vector<8x1xf32>
    %32 = vector.shape_cast %31 : vector<8x1xf32> to vector<8x1xf32>
    %33 = vector.broadcast %32 : vector<8x1xf32> to vector<8x128xf32>
    %c0_23 = arith.constant 0 : index
    %c0_24 = arith.constant 0 : index
    %34 = vector.load %arg10[%c0_23, %c0_24] : memref<8x128xf32, #tpu.memory_space<vmem>>, vector<8x128xf32>
    tpu.vector_store %arg10[%c0_23, %c0_24], %33 {strides = array<i32>} : memref<8x128xf32, #tpu.memory_space<vmem>>, vector<8x128xf32>,
    return
  }
  func.func @transform_0(%arg0: i32) -> (i32, i32) {
    %c0_i32 = arith.constant 0 : i32
    %c0_i32_0 = arith.constant 0 : i32
    return %arg0, %c0_i32 : i32, i32
  }
  func.func @transform_1(%arg0: i32) -> (i32, i32) {
    %c0_i32 = arith.constant 0 : i32
    %c0_i32_0 = arith.constant 0 : i32
    %c0_i32_1 = arith.constant 0 : i32
    return %c0_i32, %c0_i32_0 : i32, i32
  }
  func.func @transform_2(%arg0: i32) -> (i32, i32) {
    %c0_i32 = arith.constant 0 : i32
    %c0_i32_0 = arith.constant 0 : i32
    %c0_i32_1 = arith.constant 0 : i32
    return %c0_i32, %c0_i32_0 : i32, i32
  }
  func.func @transform_3(%arg0: i32) -> (i32, i32) {
    %c0_i32 = arith.constant 0 : i32
    %c0_i32_0 = arith.constant 0 : i32
    %c0_i32_1 = arith.constant 0 : i32
    return %c0_i32, %c0_i32_0 : i32, i32
  }
  func.func @transform_4(%arg0: i32) -> (i32, i32) {
    %c0_i32 = arith.constant 0 : i32
    %c0_i32_0 = arith.constant 0 : i32
    %c0_i32_1 = arith.constant 0 : i32
    return %c0_i32, %c0_i32_0 : i32, i32
  }
  func.func @transform_5(%arg0: i32) -> (i32, i32) {
    %c0_i32 = arith.constant 0 : i32
    %c0_i32_0 = arith.constant 0 : i32
    %c0_i32_1 = arith.constant 0 : i32
    return %c0_i32, %c0_i32_0 : i32, i32
  }
  func.func @transform_6(%arg0: i32) -> (i32, i32) {
    %c0_i32 = arith.constant 0 : i32
    %c0_i32_0 = arith.constant 0 : i32
    %c0_i32_1 = arith.constant 0 : i32
    return %c0_i32, %c0_i32_0 : i32, i32
  }
  func.func @transform_7(%arg0: i32) -> (i32, i32) {
    %c0_i32 = arith.constant 0 : i32
    %c0_i32_0 = arith.constant 0 : i32
    %c0_i32_1 = arith.constant 0 : i32
    return %c0_i32, %c0_i32_0 : i32, i32
  }
  func.func @transform_8(%arg0: i32) -> (i32, i32) {
    %c0_i32 = arith.constant 0 : i32
    %c0_i32_0 = arith.constant 0 : i32
    %c0_i32_1 = arith.constant 0 : i32
    return %c0_i32, %c0_i32_0 : i32, i32
  }
  func.func @transform_9(%arg0: i32) -> (i32, i32) {
    %c0_i32 = arith.constant 0 : i32
    %c0_i32_0 = arith.constant 0 : i32
    return %arg0, %c0_i32 : i32, i32
  }
}

</mosaic_0001>

<llo_original>
// kernel: tpu_custom_call.1
$region0: #{tpu_custom_call.1}
  #allocation0 [shape = 'u32[]', space=smem, size = 0x4, offset = 0x4, fixed_abs, tag = 'smem constant byte address 0x4 - core index']
  #allocation1 [shape = 'u32[72,128]{1,0:T(1,128)}', space=vmem, size = 0x9000, scoped, tag = 'internal scratch']
  #allocation2 [shape = 'f32[1,1]{1,0:T(1,128)S(1)}', space=vmem, size = 0x200, scoped, tag = 'scoped memory for tpu_custom_call.1']
  %s0 = inlined_call_operand.hbm [shape: bf16[8,32], index: 0, kind: input, shape index: {}]
  %s1 = inlined_call_operand.hbm [shape: bf16[32,512], index: 1, kind: input, shape index: {}]
  %s2 = inlined_call_operand.hbm [shape: f32[1,512], index: 2, kind: input, shape index: {}]
  %s3 = inlined_call_operand.hbm [shape: bf16[512,256], index: 3, kind: input, shape index: {}]
  %s4 = inlined_call_operand.vmem [shape: f32[1,256], index: 4, kind: input, shape index: {}]
  %s5 = inlined_call_operand.hbm [shape: bf16[256,128], index: 5, kind: input, shape index: {}]
  %s6 = inlined_call_operand.vmem [shape: f32[1,128], index: 6, kind: input, shape index: {}]
  %s7 = inlined_call_operand.vmem [shape: f32[1,128], index: 7, kind: input, shape index: {}]
  %s8 = inlined_call_operand.<no memory space> [shape: f32[1,1], index: 8, kind: input, shape index: {}]
  %s9 = inlined_call_operand.hbm [shape: f32[8,128], index: 9, kind: output, shape index: {}]
  %s10 = sld [smem:[#allocation0]]
  $region66: #{tpu_custom_call.1} parent=0
    _
  %s12 = ssub.s32 1, %s10
  %s13 = scalar_select 0, %s12, %s10
  %v14 = vstv %s8
  %15 = vst [vmem:[#allocation2] sm:$0x1] %v14
  $region1: #{tpu_custom_call.1} parent=0
    #allocation3 [shape = 'u8[2048]{0}', space=vmem, size = 0x800, scoped, tag = 'input window, operand 0, single buffered']
    #allocation4 [shape = 's32[1]{0}', space=sflag, size = 0x4, scoped, tag = 'scoped memory for tpu_custom_call.1']
    #allocation5 [shape = 's32[1]{0}', space=sflag, size = 0x4, scoped, tag = 'scoped memory for tpu_custom_call.1']
    #allocation6 [shape = 'u8[32768]{0}', space=vmem, size = 0x8000, scoped, tag = 'input window, operand 1, single buffered']
    #allocation7 [shape = 's32[1]{0}', space=sflag, size = 0x4, scoped, tag = 'scoped memory for tpu_custom_call.1']
    #allocation8 [shape = 'u8[2048]{0}', space=vmem, size = 0x800, scoped, tag = 'input window, operand 2, single buffered']
    #allocation9 [shape = 'u8[262144]{0}', space=vmem, size = 0x40000, scoped, tag = 'input window, operand 3, single buffered']
    #allocation10 [shape = 's32[1]{0}', space=sflag, size = 0x4, scoped, tag = 'scoped memory for tpu_custom_call.1']
    #allocation11 [shape = 'u8[65536]{0}', space=vmem, size = 0x10000, scoped, tag = 'input window, operand 5, single buffered']
    #allocation12 [shape = 'u8[4096]{0}', space=vmem, size = 0x1000, scoped, tag = 'output window, operand 0, single buffered']
    %16 = vsyncpa [#allocation4], 0
    %17 = vsyncpa [#allocation7], 0
    %18 = vsyncpa [#allocation10], 0
    %19 = vsyncpa [#allocation5], 0
    // Predicated region
    $region2: #{tpu_custom_call.1} parent=1 // pred_check
      _
    $region3: #{tpu_custom_call.1} parent=1 // pred_check_branch
      %21 = sbr.rel (0) target = $region5
    $region4: #{tpu_custom_call.1} parent=1 // pred_region
      %23 = vsyncadd [#allocation4], 0
      %s25 = sshll.u32 %s0, 4
      %s26 = int_to_ptr.hbm [resolvable:$true] %s25
      %s27 = sshll.u32 [#allocation3], 4
      %s28 = int_to_ptr.vmem [resolvable:$true] %s27
      %30 = dma.hbm_to_vmem [thread:$0]  %s26, 64, %s28, [#allocation4]
    $region5: #{tpu_custom_call.1} parent=1 // pred_fallthru
      _
    // Predicated region
    $region6: #{tpu_custom_call.1} parent=1 // pred_check
      _
    $region7: #{tpu_custom_call.1} parent=1 // pred_check_branch
      %32 = sbr.rel (0) target = $region9
    $region8: #{tpu_custom_call.1} parent=1 // pred_region
      %34 = vsyncadd [#allocation7], 0
      %s35 = sshll.u32 %s1, 4
      %s36 = int_to_ptr.hbm [resolvable:$true] %s35
      %s37 = sshll.u32 [#allocation6], 4
      %s38 = int_to_ptr.vmem [resolvable:$true] %s37
      %43 = dma.hbm_to_vmem [thread:$0]  %s36, 1024, %s38, [#allocation7], 256, 256, 16
    $region9: #{tpu_custom_call.1} parent=1 // pred_fallthru
      _
    // Predicated region
    $region10: #{tpu_custom_call.1} parent=1 // pred_check
      _
    $region11: #{tpu_custom_call.1} parent=1 // pred_check_branch
      %45 = sbr.rel (0) target = $region13
    $region12: #{tpu_custom_call.1} parent=1 // pred_region
      %47 = vsyncadd [#allocation7], 0
      %s49 = sshll.u32 %s2, 4
      %s50 = int_to_ptr.hbm [resolvable:$true] %s49
      %s51 = sshll.u32 [#allocation8], 4
      %s52 = int_to_ptr.vmem [resolvable:$true] %s51
      %54 = dma.hbm_to_vmem [thread:$0]  %s50, 64, %s52, [#allocation7]
    $region13: #{tpu_custom_call.1} parent=1 // pred_fallthru
      _
    // Predicated region
    $region14: #{tpu_custom_call.1} parent=1 // pred_check
      _
    $region15: #{tpu_custom_call.1} parent=1 // pred_check_branch
      %56 = sbr.rel (0) target = $region17
    $region16: #{tpu_custom_call.1} parent=1 // pred_region
      %58 = vsyncadd [#allocation10], 0
      %s59 = sshll.u32 %s3, 4
      %s60 = int_to_ptr.hbm [resolvable:$true] %s59
      %s61 = sshll.u32 [#allocation9], 4
      %s62 = int_to_ptr.vmem [resolvable:$true] %s61
      %67 = dma.hbm_to_vmem [thread:$0]  %s60, 8192, %s62, [#allocation10], 128, 128, 8
    $region17: #{tpu_custom_call.1} parent=1 // pred_fallthru
      _
    // Predicated region
    $region18: #{tpu_custom_call.1} parent=1 // pred_check
      _
    $region19: #{tpu_custom_call.1} parent=1 // pred_check_branch
      %69 = sbr.rel (0) target = $region21
    $region20: #{tpu_custom_call.1} parent=1 // pred_region
      _
    $region21: #{tpu_custom_call.1} parent=1 // pred_fallthru
      _
    // Predicated region
    $region22: #{tpu_custom_call.1} parent=1 // pred_check
      _
    $region23: #{tpu_custom_call.1} parent=1 // pred_check_branch
      %71 = sbr.rel (0) target = $region25
    $region24: #{tpu_custom_call.1} parent=1 // pred_region
      %73 = vsyncadd [#allocation10], 0
      %s74 = sshll.u32 %s5, 4
      %s75 = int_to_ptr.hbm [resolvable:$true] %s74
      %s76 = sshll.u32 [#allocation11], 4
      %s77 = int_to_ptr.vmem [resolvable:$true] %s76
      %82 = dma.hbm_to_vmem [thread:$0]  %s75, 2048, %s77, [#allocation10], 64, 64, 4
    $region25: #{tpu_custom_call.1} parent=1 // pred_fallthru
      _
    // Predicated region
    $region26: #{tpu_custom_call.1} parent=1 // pred_check
      _
    $region27: #{tpu_custom_call.1} parent=1 // pred_check_branch
      %84 = sbr.rel (0) target = $region29
    $region28: #{tpu_custom_call.1} parent=1 // pred_region
      _
    $region29: #{tpu_custom_call.1} parent=1 // pred_fallthru
      _
    // Predicated region
    $region30: #{tpu_custom_call.1} parent=1 // pred_check
      _
    $region31: #{tpu_custom_call.1} parent=1 // pred_check_branch
      %86 = sbr.rel (0) target = $region33
    $region32: #{tpu_custom_call.1} parent=1 // pred_region
      _
    $region33: #{tpu_custom_call.1} parent=1 // pred_fallthru
      _
    // Predicated region
    $region34: #{tpu_custom_call.1} parent=1 // pred_check
      _
    $region35: #{tpu_custom_call.1} parent=1 // pred_check_branch
      %88 = sbr.rel (0) target = $region37
    $region36: #{tpu_custom_call.1} parent=1 // pred_region
      _
    $region37: #{tpu_custom_call.1} parent=1 // pred_fallthru
      _
    // Predicated region
    $region38: #{tpu_custom_call.1} parent=1 // pred_check
      _
    $region39: #{tpu_custom_call.1} parent=1 // pred_check_branch
      %90 = sbr.rel (0) target = $region41
    $region40: #{tpu_custom_call.1} parent=1 // pred_region
      %92 = dma.done [#allocation4], 64
    $region41: #{tpu_custom_call.1} parent=1 // pred_fallthru
      _
    // Predicated region
    $region42: #{tpu_custom_call.1} parent=1 // pred_check
      _
    $region43: #{tpu_custom_call.1} parent=1 // pred_check_branch
      %94 = sbr.rel (0) target = $region45
    $region44: #{tpu_custom_call.1} parent=1 // pred_region
      %96 = dma.done [#allocation7], 1024
    $region45: #{tpu_custom_call.1} parent=1 // pred_fallthru
      _
    // Predicated region
    $region46: #{tpu_custom_call.1} parent=1 // pred_check
      _
    $region47: #{tpu_custom_call.1} parent=1 // pred_check_branch
      %98 = sbr.rel (0) target = $region49
    $region48: #{tpu_custom_call.1} parent=1 // pred_region
      %100 = dma.done [#allocation7], 64
    $region49: #{tpu_custom_call.1} parent=1 // pred_fallthru
      _
    // Predicated region
    $region50: #{tpu_custom_call.1} parent=1 // pred_check
      _
    $region51: #{tpu_custom_call.1} parent=1 // pred_check_branch
      %102 = sbr.rel (0) target = $region53
    $region52: #{tpu_custom_call.1} parent=1 // pred_region
      %104 = dma.done [#allocation10], 8192
    $region53: #{tpu_custom_call.1} parent=1 // pred_fallthru
      _
    // Predicated region
    $region54: #{tpu_custom_call.1} parent=1 // pred_check
      _
    $region55: #{tpu_custom_call.1} parent=1 // pred_check_branch
      %106 = sbr.rel (0) target = $region57
    $region56: #{tpu_custom_call.1} parent=1 // pred_region
      %108 = dma.done [#allocation10], 2048
    $region57: #{tpu_custom_call.1} parent=1 // pred_fallthru
      _
    %v110 = vld [vmem:[#allocation3] sm:$0xf]
    %v111 = vld [vmem:[#allocation6] sm:$0xff]
    %v112 = vld [vmem:[#allocation6 + $0x8] sm:$0xff]
    %v113 = vld [vmem:[#allocation6 + $0x10] sm:$0xff]
    %v114 = vld [vmem:[#allocation6 + $0x18] sm:$0xff]
    %v115 = vld [vmem:[#allocation6 + $0x20] sm:$0xff]
    %v116 = vld [vmem:[#allocation6 + $0x28] sm:$0xff]
    %v117 = vld [vmem:[#allocation6 + $0x30] sm:$0xff]
    %v118 = vld [vmem:[#allocation6 + $0x38] sm:$0xff]
    %v119 = vld [vmem:[#allocation8] sm:$0xf]
    %v121 = vperm.slane %v119, 0
    %v122 = vperm.slane %v119, 1
    %v123 = vperm.slane %v119, 2
    %v124 = vperm.slane %v119, 3
    %v137 = vunpack.c.l.b16 %v111
    %v138 = vunpack.c.h.b16 %v111
    %v139 = vunpack.c.l.b16 %v112
    %v140 = vunpack.c.h.b16 %v112
    %v141 = vunpack.c.l.b16 %v113
    %v142 = vunpack.c.h.b16 %v113
    %v143 = vunpack.c.l.b16 %v114
    %v144 = vunpack.c.h.b16 %v114
    %v145 = vunpack.c.l.b16 %v115
    %v146 = vunpack.c.h.b16 %v115
    %v147 = vunpack.c.l.b16 %v116
    %v148 = vunpack.c.h.b16 %v116
    %v149 = vunpack.c.l.b16 %v117
    %v150 = vunpack.c.h.b16 %v117
    %v151 = vunpack.c.l.b16 %v118
    %v152 = vunpack.c.h.b16 %v118
    %v153 = vpack.c.b16 %v141, %v137
    %v154 = vpack.c.b16 %v142, %v138
    %v155 = vpack.c.b16 %v143, %v139
    %v156 = vpack.c.b16 %v144, %v140
    %v157 = vpack.c.b16 %v149, %v145
    %v158 = vpack.c.b16 %v150, %v146
    %v159 = vpack.c.b16 %v151, %v147
    %v160 = vpack.c.b16 %v152, %v148
    %vm169 = vcmask 261120
    %v171 = vsel %vm169, %v110, 0
    %173 = vmatpush.bf16.msra.mxu0 0
    %174 = vmatpush.bf16.msra.mxu0 0
    %175 = vmatpush.bf16.msra.mxu0 0
    %176 = vmatpush.bf16.msra.mxu0 0
    %177 = vmatpush.bf16.msra.mxu0 0
    %178 = vmatpush.bf16.msra.mxu0 0
    %179 = vmatpush.bf16.msra.mxu0 %v157
    %180 = vmatpush.bf16.msra.mxu0 %v153
    %181 = vmatmul.bf16.gmra.mxu0 %v171
    %v182 = vpop.f32.mrf.mxu0
    %v183 = vadd.f32 %v121, %v182
    %v184 = vpop.f32.mrf.mxu0
    %185 = vdwg.mxu0
    %186 = vmatpush.bf16.msra.mxu0 0
    %187 = vmatpush.bf16.msra.mxu0 0
    %188 = vmatpush.bf16.msra.mxu0 0
    %189 = vmatpush.bf16.msra.mxu0 0
    %190 = vmatpush.bf16.msra.mxu0 0
    %191 = vmatpush.bf16.msra.mxu0 0
    %192 = vmatpush.bf16.msra.mxu0 %v158
    %193 = vmatpush.bf16.msra.mxu0 %v154
    %194 = vmatmul.bf16.gmra.mxu0 %v171
    %v195 = vpop.f32.mrf.mxu0
    %v196 = vadd.f32 %v122, %v195
    %v197 = vpop.f32.mrf.mxu0
    %198 = vdwg.mxu0
    %199 = vmatpush.bf16.msra.mxu0 0
    %200 = vmatpush.bf16.msra.mxu0 0
    %201 = vmatpush.bf16.msra.mxu0 0
    %202 = vmatpush.bf16.msra.mxu0 0
    %203 = vmatpush.bf16.msra.mxu0 0
    %204 = vmatpush.bf16.msra.mxu0 0
    %205 = vmatpush.bf16.msra.mxu0 %v159
    %206 = vmatpush.bf16.msra.mxu0 %v155
    %207 = vmatmul.bf16.gmra.mxu0 %v171
    %v208 = vpop.f32.mrf.mxu0
    %v209 = vadd.f32 %v123, %v208
    %v210 = vpop.f32.mrf.mxu0
    %211 = vdwg.mxu0
    %212 = vmatpush.bf16.msra.mxu0 0
    %213 = vmatpush.bf16.msra.mxu0 0
    %214 = vmatpush.bf16.msra.mxu0 0
    %215 = vmatpush.bf16.msra.mxu0 0
    %216 = vmatpush.bf16.msra.mxu0 0
    %217 = vmatpush.bf16.msra.mxu0 0
    %218 = vmatpush.bf16.msra.mxu0 %v160
    %219 = vmatpush.bf16.msra.mxu0 %v156
    %220 = vmatmul.bf16.gmra.mxu0 %v171
    %v221 = vpop.f32.mrf.mxu0
    %v222 = vadd.f32 %v124, %v221
    %v223 = vpop.f32.mrf.mxu0
    %224 = vdwg.mxu0
    %v225 = vmax.f32 %v183, 0.0
    %v226 = vmax.f32 %v196, 0.0
    %v227 = vmax.f32 %v209, 0.0
    %v228 = vmax.f32 %v222, 0.0
    %v229 = vpack.c.bf16 %v225, %v225
    %v230 = vpack.c.bf16 %v226, %v226
    %v231 = vpack.c.bf16 %v227, %v227
    %v232 = vpack.c.bf16 %v228, %v228
    %v233 = vld [vmem:[#allocation9] sm:$0xff]
    %v234 = vld [vmem:[#allocation9 + $0x8] sm:$0xff]
    %v235 = vld [vmem:[#allocation9 + $0x10] sm:$0xff]
    %v236 = vld [vmem:[#allocation9 + $0x18] sm:$0xff]
    %v237 = vld [vmem:[#allocation9 + $0x20] sm:$0xff]
    %v238 = vld [vmem:[#allocation9 + $0x28] sm:$0xff]
    %v239 = vld [vmem:[#allocation9 + $0x30] sm:$0xff]
    %v240 = vld [vmem:[#allocation9 + $0x38] sm:$0xff]
    %v241 = vld [vmem:[#allocation9 + $0x40] sm:$0xff]
    %v242 = vld [vmem:[#allocation9 + $0x48] sm:$0xff]
    %v243 = vld [vmem:[#allocation9 + $0x50] sm:$0xff]
    %v244 = vld [vmem:[#allocation9 + $0x58] sm:$0xff]
    %v245 = vld [vmem:[#allocation9 + $0x60] sm:$0xff]
    %v246 = vld [vmem:[#allocation9 + $0x68] sm:$0xff]
    %v247 = vld [vmem:[#allocation9 + $0x70] sm:$0xff]
    %v248 = vld [vmem:[#allocation9 + $0x78] sm:$0xff]
    %v249 = vld [vmem:[#allocation9 + $0x80] sm:$0xff]
    %v250 = vld [vmem:[#allocation9 + $0x88] sm:$0xff]
    %v251 = vld [vmem:[#allocation9 + $0x90] sm:$0xff]
    %v252 = vld [vmem:[#allocation9 + $0x98] sm:$0xff]
    %v253 = vld [vmem:[#allocation9 + $0xa0] sm:$0xff]
    %v254 = vld [vmem:[#allocation9 + $0xa8] sm:$0xff]
    %v255 = vld [vmem:[#allocation9 + $0xb0] sm:$0xff]
    %v256 = vld [vmem:[#allocation9 + $0xb8] sm:$0xff]
    %v257 = vld [vmem:[#allocation9 + $0xc0] sm:$0xff]
    %v258 = vld [vmem:[#allocation9 + $0xc8] sm:$0xff]
    %v259 = vld [vmem:[#allocation9 + $0xd0] sm:$0xff]
    %v260 = vld [vmem:[#allocation9 + $0xd8] sm:$0xff]
    %v261 = vld [vmem:[#allocation9 + $0xe0] sm:$0xff]
    %v262 = vld [vmem:[#allocation9 + $0xe8] sm:$0xff]
    %v263 = vld [vmem:[#allocation9 + $0xf0] sm:$0xff]
    %v264 = vld [vmem:[#allocation9 + $0xf8] sm:$0xff]
    %v265 = vld [vmem:[#allocation9 + $0x100] sm:$0xff]
    %v266 = vld [vmem:[#allocation9 + $0x108] sm:$0xff]
    %v267 = vld [vmem:[#allocation9 + $0x110] sm:$0xff]
    %v268 = vld [vmem:[#allocation9 + $0x118] sm:$0xff]
    %v269 = vld [vmem:[#allocation9 + $0x120] sm:$0xff]
    %v270 = vld [vmem:[#allocation9 + $0x128] sm:$0xff]
    %v271 = vld [vmem:[#allocation9 + $0x130] sm:$0xff]
    %v272 = vld [vmem:[#allocation9 + $0x138] sm:$0xff]
    %v273 = vld [vmem:[#allocation9 + $0x140] sm:$0xff]
    %v274 = vld [vmem:[#allocation9 + $0x148] sm:$0xff]
    %v275 = vld [vmem:[#allocation9 + $0x150] sm:$0xff]
    %v276 = vld [vmem:[#allocation9 + $0x158] sm:$0xff]
    %v277 = vld [vmem:[#allocation9 + $0x160] sm:$0xff]
    %v278 = vld [vmem:[#allocation9 + $0x168] sm:$0xff]
    %v279 = vld [vmem:[#allocation9 + $0x170] sm:$0xff]
    %v280 = vld [vmem:[#allocation9 + $0x178] sm:$0xff]
    %v281 = vld [vmem:[#allocation9 + $0x180] sm:$0xff]
    %v282 = vld [vmem:[#allocation9 + $0x188] sm:$0xff]
    %v283 = vld [vmem:[#allocation9 + $0x190] sm:$0xff]
    %v284 = vld [vmem:[#allocation9 + $0x198] sm:$0xff]
    %v285 = vld [vmem:[#allocation9 + $0x1a0] sm:$0xff]
    %v286 = vld [vmem:[#allocation9 + $0x1a8] sm:$0xff]
    %v287 = vld [vmem:[#allocation9 + $0x1b0] sm:$0xff]
    %v288 = vld [vmem:[#allocation9 + $0x1b8] sm:$0xff]
    %v289 = vld [vmem:[#allocation9 + $0x1c0] sm:$0xff]
    %v290 = vld [vmem:[#allocation9 + $0x1c8] sm:$0xff]
    %v291 = vld [vmem:[#allocation9 + $0x1d0] sm:$0xff]
    %v292 = vld [vmem:[#allocation9 + $0x1d8] sm:$0xff]
    %v293 = vld [vmem:[#allocation9 + $0x1e0] sm:$0xff]
    %v294 = vld [vmem:[#allocation9 + $0x1e8] sm:$0xff]
    %v295 = vld [vmem:[#allocation9 + $0x1f0] sm:$0xff]
    %v296 = vld [vmem:[#allocation9 + $0x1f8] sm:$0xff]
    %v297 = vld [vmem:[%s4] sm:$0x3]
    %v299 = vperm.slane %v297, 0
    %v300 = vperm.slane %v297, 1
    %v367 = vunpack.c.l.b16 %v233
    %v368 = vunpack.c.h.b16 %v233
    %v369 = vunpack.c.l.b16 %v234
    %v370 = vunpack.c.h.b16 %v234
    %v371 = vunpack.c.l.b16 %v235
    %v372 = vunpack.c.h.b16 %v235
    %v373 = vunpack.c.l.b16 %v236
    %v374 = vunpack.c.h.b16 %v236
    %v375 = vunpack.c.l.b16 %v237
    %v376 = vunpack.c.h.b16 %v237
    %v377 = vunpack.c.l.b16 %v238
    %v378 = vunpack.c.h.b16 %v238
    %v379 = vunpack.c.l.b16 %v239
    %v380 = vunpack.c.h.b16 %v239
    %v381 = vunpack.c.l.b16 %v240
    %v382 = vunpack.c.h.b16 %v240
    %v383 = vunpack.c.l.b16 %v241
    %v384 = vunpack.c.h.b16 %v241
    %v385 = vunpack.c.l.b16 %v242
    %v386 = vunpack.c.h.b16 %v242
    %v387 = vunpack.c.l.b16 %v243
    %v388 = vunpack.c.h.b16 %v243
    %v389 = vunpack.c.l.b16 %v244
    %v390 = vunpack.c.h.b16 %v244
    %v391 = vunpack.c.l.b16 %v245
    %v392 = vunpack.c.h.b16 %v245
    %v393 = vunpack.c.l.b16 %v246
    %v394 = vunpack.c.h.b16 %v246
    %v395 = vunpack.c.l.b16 %v247
    %v396 = vunpack.c.h.b16 %v247
    %v397 = vunpack.c.l.b16 %v248
    %v398 = vunpack.c.h.b16 %v248
    %v399 = vunpack.c.l.b16 %v249
    %v400 = vunpack.c.h.b16 %v249
    %v401 = vunpack.c.l.b16 %v250
    %v402 = vunpack.c.h.b16 %v250
    %v403 = vunpack.c.l.b16 %v251
    %v404 = vunpack.c.h.b16 %v251
    %v405 = vunpack.c.l.b16 %v252
    %v406 = vunpack.c.h.b16 %v252
    %v407 = vunpack.c.l.b16 %v253
    %v408 = vunpack.c.h.b16 %v253
    %v409 = vunpack.c.l.b16 %v254
    %v410 = vunpack.c.h.b16 %v254
    %v411 = vunpack.c.l.b16 %v255
    %v412 = vunpack.c.h.b16 %v255
    %v413 = vunpack.c.l.b16 %v256
    %v414 = vunpack.c.h.b16 %v256
    %v415 = vunpack.c.l.b16 %v257
    %v416 = vunpack.c.h.b16 %v257
    %v417 = vunpack.c.l.b16 %v258
    %v418 = vunpack.c.h.b16 %v258
    %v419 = vunpack.c.l.b16 %v259
    %v420 = vunpack.c.h.b16 %v259
    %v421 = vunpack.c.l.b16 %v260
    %v422 = vunpack.c.h.b16 %v260
    %v423 = vunpack.c.l.b16 %v261
    %v424 = vunpack.c.h.b16 %v261
    %v425 = vunpack.c.l.b16 %v262
    %v426 = vunpack.c.h.b16 %v262
    %v427 = vunpack.c.l.b16 %v263
    %v428 = vunpack.c.h.b16 %v263
    %v429 = vunpack.c.l.b16 %v264
    %v430 = vunpack.c.h.b16 %v264
    %v431 = vunpack.c.l.b16 %v265
    %v432 = vunpack.c.h.b16 %v265
    %v433 = vunpack.c.l.b16 %v266
    %v434 = vunpack.c.h.b16 %v266
    %v435 = vunpack.c.l.b16 %v267
    %v436 = vunpack.c.h.b16 %v267
    %v437 = vunpack.c.l.b16 %v268
    %v438 = vunpack.c.h.b16 %v268
    %v439 = vunpack.c.l.b16 %v269
    %v440 = vunpack.c.h.b16 %v269
    %v441 = vunpack.c.l.b16 %v270
    %v442 = vunpack.c.h.b16 %v270
    %v443 = vunpack.c.l.b16 %v271
    %v444 = vunpack.c.h.b16 %v271
    %v445 = vunpack.c.l.b16 %v272
    %v446 = vunpack.c.h.b16 %v272
    %v447 = vunpack.c.l.b16 %v273
    %v448 = vunpack.c.h.b16 %v273
    %v449 = vunpack.c.l.b16 %v274
    %v450 = vunpack.c.h.b16 %v274
    %v451 = vunpack.c.l.b16 %v275
    %v452 = vunpack.c.h.b16 %v275
    %v453 = vunpack.c.l.b16 %v276
    %v454 = vunpack.c.h.b16 %v276
    %v455 = vunpack.c.l.b16 %v277
    %v456 = vunpack.c.h.b16 %v277
    %v457 = vunpack.c.l.b16 %v278
    %v458 = vunpack.c.h.b16 %v278
    %v459 = vunpack.c.l.b16 %v279
    %v460 = vunpack.c.h.b16 %v279
    %v461 = vunpack.c.l.b16 %v280
    %v462 = vunpack.c.h.b16 %v280
    %v463 = vunpack.c.l.b16 %v281
    %v464 = vunpack.c.h.b16 %v281
    %v465 = vunpack.c.l.b16 %v282
    %v466 = vunpack.c.h.b16 %v282
    %v467 = vunpack.c.l.b16 %v283
    %v468 = vunpack.c.h.b16 %v283
    %v469 = vunpack.c.l.b16 %v284
    %v470 = vunpack.c.h.b16 %v284
    %v471 = vunpack.c.l.b16 %v285
    %v472 = vunpack.c.h.b16 %v285
    %v473 = vunpack.c.l.b16 %v286
    %v474 = vunpack.c.h.b16 %v286
    %v475 = vunpack.c.l.b16 %v287
    %v476 = vunpack.c.h.b16 %v287
    %v477 = vunpack.c.l.b16 %v288
    %v478 = vunpack.c.h.b16 %v288
    %v479 = vunpack.c.l.b16 %v289
    %v480 = vunpack.c.h.b16 %v289
    %v481 = vunpack.c.l.b16 %v290
    %v482 = vunpack.c.h.b16 %v290
    %v483 = vunpack.c.l.b16 %v291
    %v484 = vunpack.c.h.b16 %v291
    %v485 = vunpack.c.l.b16 %v292
    %v486 = vunpack.c.h.b16 %v292
    %v487 = vunpack.c.l.b16 %v293
    %v488 = vunpack.c.h.b16 %v293
    %v489 = vunpack.c.l.b16 %v294
    %v490 = vunpack.c.h.b16 %v294
    %v491 = vunpack.c.l.b16 %v295
    %v492 = vunpack.c.h.b16 %v295
    %v493 = vunpack.c.l.b16 %v296
    %v494 = vunpack.c.h.b16 %v296
    %v495 = vpack.c.b16 %v369, %v367
    %v496 = vpack.c.b16 %v370, %v368
    %v497 = vpack.c.b16 %v373, %v371
    %v498 = vpack.c.b16 %v374, %v372
    %v499 = vpack.c.b16 %v377, %v375
    %v500 = vpack.c.b16 %v378, %v376
    %v501 = vpack.c.b16 %v381, %v379
    %v502 = vpack.c.b16 %v382, %v380
    %v503 = vpack.c.b16 %v385, %v383
    %v504 = vpack.c.b16 %v386, %v384
    %v505 = vpack.c.b16 %v389, %v387
    %v506 = vpack.c.b16 %v390, %v388
    %v507 = vpack.c.b16 %v393, %v391
    %v508 = vpack.c.b16 %v394, %v392
    %v509 = vpack.c.b16 %v397, %v395
    %v510 = vpack.c.b16 %v398, %v396
    %v511 = vpack.c.b16 %v401, %v399
    %v512 = vpack.c.b16 %v402, %v400
    %v513 = vpack.c.b16 %v405, %v403
    %v514 = vpack.c.b16 %v406, %v404
    %v515 = vpack.c.b16 %v409, %v407
    %v516 = vpack.c.b16 %v410, %v408
    %v517 = vpack.c.b16 %v413, %v411
    %v518 = vpack.c.b16 %v414, %v412
    %v519 = vpack.c.b16 %v417, %v415
    %v520 = vpack.c.b16 %v418, %v416
    %v521 = vpack.c.b16 %v421, %v419
    %v522 = vpack.c.b16 %v422, %v420
    %v523 = vpack.c.b16 %v425, %v423
    %v524 = vpack.c.b16 %v426, %v424
    %v525 = vpack.c.b16 %v429, %v427
    %v526 = vpack.c.b16 %v430, %v428
    %v527 = vpack.c.b16 %v433, %v431
    %v528 = vpack.c.b16 %v434, %v432
    %v529 = vpack.c.b16 %v437, %v435
    %v530 = vpack.c.b16 %v438, %v436
    %v531 = vpack.c.b16 %v441, %v439
    %v532 = vpack.c.b16 %v442, %v440
    %v533 = vpack.c.b16 %v445, %v443
    %v534 = vpack.c.b16 %v446, %v444
    %v535 = vpack.c.b16 %v449, %v447
    %v536 = vpack.c.b16 %v450, %v448
    %v537 = vpack.c.b16 %v453, %v451
    %v538 = vpack.c.b16 %v454, %v452
    %v539 = vpack.c.b16 %v457, %v455
    %v540 = vpack.c.b16 %v458, %v456
    %v541 = vpack.c.b16 %v461, %v459
    %v542 = vpack.c.b16 %v462, %v460
    %v543 = vpack.c.b16 %v465, %v463
    %v544 = vpack.c.b16 %v466, %v464
    %v545 = vpack.c.b16 %v469, %v467
    %v546 = vpack.c.b16 %v470, %v468
    %v547 = vpack.c.b16 %v473, %v471
    %v548 = vpack.c.b16 %v474, %v472
    %v549 = vpack.c.b16 %v477, %v475
    %v550 = vpack.c.b16 %v478, %v476
    %v551 = vpack.c.b16 %v481, %v479
    %v552 = vpack.c.b16 %v482, %v480
    %v553 = vpack.c.b16 %v485, %v483
    %v554 = vpack.c.b16 %v486, %v484
    %v555 = vpack.c.b16 %v489, %v487
    %v556 = vpack.c.b16 %v490, %v488
    %v557 = vpack.c.b16 %v493, %v491
    %v558 = vpack.c.b16 %v494, %v492
    %623 = vmatpush.bf16.msra.mxu0 %v509
    %624 = vmatpush.bf16.msra.mxu0 %v507
    %625 = vmatpush.bf16.msra.mxu0 %v505
    %626 = vmatpush.bf16.msra.mxu0 %v503
    %627 = vmatpush.bf16.msra.mxu0 %v501
    %628 = vmatpush.bf16.msra.mxu0 %v499
    %629 = vmatpush.bf16.msra.mxu0 %v497
    %630 = vmatpush.bf16.msra.mxu0 %v495
    %631 = vmatmul.bf16.gmra.mxu0 %v229
    %v632 = vpop.f32.mrf.mxu0
    %v633 = vadd.f32 %v299, %v632
    %v634 = vpop.f32.mrf.mxu0
    %635 = vdwg.mxu0
    %636 = vmatpush.bf16.msra.mxu0 %v525
    %637 = vmatpush.bf16.msra.mxu0 %v523
    %638 = vmatpush.bf16.msra.mxu0 %v521
    %639 = vmatpush.bf16.msra.mxu0 %v519
    %640 = vmatpush.bf16.msra.mxu0 %v517
    %641 = vmatpush.bf16.msra.mxu0 %v515
    %642 = vmatpush.bf16.msra.mxu0 %v513
    %643 = vmatpush.bf16.msra.mxu0 %v511
    %644 = vmatmul.bf16.gmra.mxu0 %v230
    %v645 = vpop.f32.mrf.mxu0
    %v646 = vadd.f32 %v633, %v645
    %v647 = vpop.f32.mrf.mxu0
    %648 = vdwg.mxu0
    %649 = vmatpush.bf16.msra.mxu0 %v541
    %650 = vmatpush.bf16.msra.mxu0 %v539
    %651 = vmatpush.bf16.msra.mxu0 %v537
    %652 = vmatpush.bf16.msra.mxu0 %v535
    %653 = vmatpush.bf16.msra.mxu0 %v533
    %654 = vmatpush.bf16.msra.mxu0 %v531
    %655 = vmatpush.bf16.msra.mxu0 %v529
    %656 = vmatpush.bf16.msra.mxu0 %v527
    %657 = vmatmul.bf16.gmra.mxu0 %v231
    %v658 = vpop.f32.mrf.mxu0
    %v659 = vadd.f32 %v646, %v658
    %v660 = vpop.f32.mrf.mxu0
    %661 = vdwg.mxu0
    %662 = vmatpush.bf16.msra.mxu0 %v557
    %663 = vmatpush.bf16.msra.mxu0 %v555
    %664 = vmatpush.bf16.msra.mxu0 %v553
    %665 = vmatpush.bf16.msra.mxu0 %v551
    %666 = vmatpush.bf16.msra.mxu0 %v549
    %667 = vmatpush.bf16.msra.mxu0 %v547
    %668 = vmatpush.bf16.msra.mxu0 %v545
    %669 = vmatpush.bf16.msra.mxu0 %v543
    %670 = vmatmul.bf16.gmra.mxu0 %v232
    %v671 = vpop.f32.mrf.mxu0
    %v672 = vadd.f32 %v659, %v671
    %v673 = vpop.f32.mrf.mxu0
    %674 = vdwg.mxu0
    %675 = vmatpush.bf16.msra.mxu0 %v510
    %676 = vmatpush.bf16.msra.mxu0 %v508
    %677 = vmatpush.bf16.msra.mxu0 %v506
    %678 = vmatpush.bf16.msra.mxu0 %v504
    %679 = vmatpush.bf16.msra.mxu0 %v502
    %680 = vmatpush.bf16.msra.mxu0 %v500
    %681 = vmatpush.bf16.msra.mxu0 %v498
    %682 = vmatpush.bf16.msra.mxu0 %v496
    %683 = vmatmul.bf16.gmra.mxu0 %v229
    %v684 = vpop.f32.mrf.mxu0
    %v685 = vadd.f32 %v300, %v684
    %v686 = vpop.f32.mrf.mxu0
    %687 = vdwg.mxu0
    %688 = vmatpush.bf16.msra.mxu0 %v526
    %689 = vmatpush.bf16.msra.mxu0 %v524
    %690 = vmatpush.bf16.msra.mxu0 %v522
    %691 = vmatpush.bf16.msra.mxu0 %v520
    %692 = vmatpush.bf16.msra.mxu0 %v518
    %693 = vmatpush.bf16.msra.mxu0 %v516
    %694 = vmatpush.bf16.msra.mxu0 %v514
    %695 = vmatpush.bf16.msra.mxu0 %v512
    %696 = vmatmul.bf16.gmra.mxu0 %v230
    %v697 = vpop.f32.mrf.mxu0
    %v698 = vadd.f32 %v685, %v697
    %v699 = vpop.f32.mrf.mxu0
    %700 = vdwg.mxu0
    %701 = vmatpush.bf16.msra.mxu0 %v542
    %702 = vmatpush.bf16.msra.mxu0 %v540
    %703 = vmatpush.bf16.msra.mxu0 %v538
    %704 = vmatpush.bf16.msra.mxu0 %v536
    %705 = vmatpush.bf16.msra.mxu0 %v534
    %706 = vmatpush.bf16.msra.mxu0 %v532
    %707 = vmatpush.bf16.msra.mxu0 %v530
    %708 = vmatpush.bf16.msra.mxu0 %v528
    %709 = vmatmul.bf16.gmra.mxu0 %v231
    %v710 = vpop.f32.mrf.mxu0
    %v711 = vadd.f32 %v698, %v710
    %v712 = vpop.f32.mrf.mxu0
    %713 = vdwg.mxu0
    %714 = vmatpush.bf16.msra.mxu0 %v558
    %715 = vmatpush.bf16.msra.mxu0 %v556
    %716 = vmatpush.bf16.msra.mxu0 %v554
    %717 = vmatpush.bf16.msra.mxu0 %v552
    %718 = vmatpush.bf16.msra.mxu0 %v550
    %719 = vmatpush.bf16.msra.mxu0 %v548
    %720 = vmatpush.bf16.msra.mxu0 %v546
    %721 = vmatpush.bf16.msra.mxu0 %v544
    %722 = vmatmul.bf16.gmra.mxu0 %v232
    %v723 = vpop.f32.mrf.mxu0
    %v724 = vadd.f32 %v711, %v723
    %v725 = vpop.f32.mrf.mxu0
    %726 = vdwg.mxu0
    %v727 = vmax.f32 %v672, 0.0
    %v728 = vmax.f32 %v724, 0.0
    %v729 = vpack.c.bf16 %v727, %v727
    %v730 = vpack.c.bf16 %v728, %v728
    %v731 = vld [vmem:[#allocation11] sm:$0xf]
    %v732 = vld [vmem:[#allocation11 + $0x4] sm:$0xf]
    %v733 = vld [vmem:[#allocation11 + $0x8] sm:$0xf]
    %v734 = vld [vmem:[#allocation11 + $0xc] sm:$0xf]
    %v735 = vld [vmem:[#allocation11 + $0x10] sm:$0xf]
    %v736 = vld [vmem:[#allocation11 + $0x14] sm:$0xf]
    %v737 = vld [vmem:[#allocation11 + $0x18] sm:$0xf]
    %v738 = vld [vmem:[#allocation11 + $0x1c] sm:$0xf]
    %v739 = vld [vmem:[#allocation11 + $0x20] sm:$0xf]
    %v740 = vld [vmem:[#allocation11 + $0x24] sm:$0xf]
    %v741 = vld [vmem:[#allocation11 + $0x28] sm:$0xf]
    %v742 = vld [vmem:[#allocation11 + $0x2c] sm:$0xf]
    %v743 = vld [vmem:[#allocation11 + $0x30] sm:$0xf]
    %v744 = vld [vmem:[#allocation11 + $0x34] sm:$0xf]
    %v745 = vld [vmem:[#allocation11 + $0x38] sm:$0xf]
    %v746 = vld [vmem:[#allocation11 + $0x3c] sm:$0xf]
    %v747 = vld [vmem:[#allocation11 + $0x40] sm:$0xf]
    %v748 = vld [vmem:[#allocation11 + $0x44] sm:$0xf]
    %v749 = vld [vmem:[#allocation11 + $0x48] sm:$0xf]
    %v750 = vld [vmem:[#allocation11 + $0x4c] sm:$0xf]
    %v751 = vld [vmem:[#allocation11 + $0x50] sm:$0xf]
    %v752 = vld [vmem:[#allocation11 + $0x54] sm:$0xf]
    %v753 = vld [vmem:[#allocation11 + $0x58] sm:$0xf]
    %v754 = vld [vmem:[#allocation11 + $0x5c] sm:$0xf]
    %v755 = vld [vmem:[#allocation11 + $0x60] sm:$0xf]
    %v756 = vld [vmem:[#allocation11 + $0x64] sm:$0xf]
    %v757 = vld [vmem:[#allocation11 + $0x68] sm:$0xf]
    %v758 = vld [vmem:[#allocation11 + $0x6c] sm:$0xf]
    %v759 = vld [vmem:[#allocation11 + $0x70] sm:$0xf]
    %v760 = vld [vmem:[#allocation11 + $0x74] sm:$0xf]
    %v761 = vld [vmem:[#allocation11 + $0x78] sm:$0xf]
    %v762 = vld [vmem:[#allocation11 + $0x7c] sm:$0xf]
    %v763 = vld [vmem:[%s6] sm:$0x1]
    %v765 = vperm.slane %v763, 0
    %v799 = vunpack.c.l.b16 %v731
    %v800 = vunpack.c.l.b16 %v732
    %v801 = vunpack.c.l.b16 %v733
    %v802 = vunpack.c.l.b16 %v734
    %v803 = vunpack.c.l.b16 %v735
    %v804 = vunpack.c.l.b16 %v736
    %v805 = vunpack.c.l.b16 %v737
    %v806 = vunpack.c.l.b16 %v738
    %v807 = vunpack.c.l.b16 %v739
    %v808 = vunpack.c.l.b16 %v740
    %v809 = vunpack.c.l.b16 %v741
    %v810 = vunpack.c.l.b16 %v742
    %v811 = vunpack.c.l.b16 %v743
    %v812 = vunpack.c.l.b16 %v744
    %v813 = vunpack.c.l.b16 %v745
    %v814 = vunpack.c.l.b16 %v746
    %v815 = vunpack.c.l.b16 %v747
    %v816 = vunpack.c.l.b16 %v748
    %v817 = vunpack.c.l.b16 %v749
    %v818 = vunpack.c.l.b16 %v750
    %v819 = vunpack.c.l.b16 %v751
    %v820 = vunpack.c.l.b16 %v752
    %v821 = vunpack.c.l.b16 %v753
    %v822 = vunpack.c.l.b16 %v754
    %v823 = vunpack.c.l.b16 %v755
    %v824 = vunpack.c.l.b16 %v756
    %v825 = vunpack.c.l.b16 %v757
    %v826 = vunpack.c.l.b16 %v758
    %v827 = vunpack.c.l.b16 %v759
    %v828 = vunpack.c.l.b16 %v760
    %v829 = vunpack.c.l.b16 %v761
    %v830 = vunpack.c.l.b16 %v762
    %v831 = vpack.c.b16 %v800, %v799
    %v832 = vpack.c.b16 %v802, %v801
    %v833 = vpack.c.b16 %v804, %v803
    %v834 = vpack.c.b16 %v806, %v805
    %v835 = vpack.c.b16 %v808, %v807
    %v836 = vpack.c.b16 %v810, %v809
    %v837 = vpack.c.b16 %v812, %v811
    %v838 = vpack.c.b16 %v814, %v813
    %v839 = vpack.c.b16 %v816, %v815
    %v840 = vpack.c.b16 %v818, %v817
    %v841 = vpack.c.b16 %v820, %v819
    %v842 = vpack.c.b16 %v822, %v821
    %v843 = vpack.c.b16 %v824, %v823
    %v844 = vpack.c.b16 %v826, %v825
    %v845 = vpack.c.b16 %v828, %v827
    %v846 = vpack.c.b16 %v830, %v829
    %863 = vmatpush.bf16.msra.mxu0 %v838
    %864 = vmatpush.bf16.msra.mxu0 %v837
    %865 = vmatpush.bf16.msra.mxu0 %v836
    %866 = vmatpush.bf16.msra.mxu0 %v835
    %867 = vmatpush.bf16.msra.mxu0 %v834
    %868 = vmatpush.bf16.msra.mxu0 %v833
    %869 = vmatpush.bf16.msra.mxu0 %v832
    %870 = vmatpush.bf16.msra.mxu0 %v831
    %871 = vmatmul.bf16.gmra.mxu0 %v729
    %v872 = vpop.f32.mrf.mxu0
    %v873 = vadd.f32 %v765, %v872
    %v874 = vpop.f32.mrf.mxu0
    %875 = vdwg.mxu0
    %876 = vmatpush.bf16.msra.mxu0 %v846
    %877 = vmatpush.bf16.msra.mxu0 %v845
    %878 = vmatpush.bf16.msra.mxu0 %v844
    %879 = vmatpush.bf16.msra.mxu0 %v843
    %880 = vmatpush.bf16.msra.mxu0 %v842
    %881 = vmatpush.bf16.msra.mxu0 %v841
    %882 = vmatpush.bf16.msra.mxu0 %v840
    %883 = vmatpush.bf16.msra.mxu0 %v839
    %884 = vmatmul.bf16.gmra.mxu0 %v730
    %v885 = vpop.f32.mrf.mxu0
    %v886 = vadd.f32 %v873, %v885
    %v887 = vpop.f32.mrf.mxu0
    %888 = vdwg.mxu0
    %v889 = vmax.f32 %v886, 0.0
    %v890 = vld [vmem:[%s7] sm:$0x1]
    %v892 = vperm.slane %v890, 0
    %v894 = vmul.f32 %v889, %v892
    %895 = vadd.xlane.f32.xlu0 %v894
    %v896 = vpop.xlane.xlu0 %895
    %v897 = vld [vmem:[#allocation2] sm:$0x1]
    %v899 = vperm.slane %v897, 0
    %v901 = vadd.f32 %v896, %v899
    %903 = vset.pattern.permute.xlu0 0
    %904 = vperm.xlu0 %903, %v901
    %v905 = vpop.permute.xlu0 %904
    %907 = vst [vmem:[#allocation12] sm:$0xff] %v905
    // Predicated region
    $region58: #{tpu_custom_call.1} parent=1 // pred_check
      _
    $region59: #{tpu_custom_call.1} parent=1 // pred_check_branch
      %909 = sbr.rel (0) target = $region61
    $region60: #{tpu_custom_call.1} parent=1 // pred_region
      %911 = vsyncadd [#allocation5], 0
      %s913 = sshll.u32 [#allocation12], 4
      %s914 = int_to_ptr.vmem [resolvable:$true] %s913
      %s915 = sshll.u32 %s9, 4
      %s916 = int_to_ptr.hbm [resolvable:$true] %s915
      %918 = dma.vmem_to_hbm [thread:$0]  %s914, 128, %s916, [#allocation5]
    $region61: #{tpu_custom_call.1} parent=1 // pred_fallthru
      _
    // Predicated region
    $region62: #{tpu_custom_call.1} parent=1 // pred_check
      _
    $region63: #{tpu_custom_call.1} parent=1 // pred_check_branch
      %920 = sbr.rel (0) target = $region65
    $region64: #{tpu_custom_call.1} parent=1 // pred_region
      %922 = dma.done [#allocation5], 128
    $region65: #{tpu_custom_call.1} parent=1 // pred_fallthru
      _
    %923 = vsyncpa [#allocation4], 1
    %924 = vsyncpa [#allocation7], 1
    %925 = vsyncpa [#allocation10], 1
    %926 = vsyncpa [#allocation5], 1

</llo_original>
